<compile_context>
chip_gen: v5e
topology: v5e:2x2
jax: 0.10.0
libtpu: 0.0.40
codegen_flags: <defaults>
</compile_context>

<pallas_src>
import functools

import jax
import jax.numpy as jnp
from jax.experimental import pallas as pl
from jax.experimental.pallas import tpu as pltpu


def _deepset_kernel(x_ref, w1_ref, b1_ref, w2_ref, b2_ref,
                    w3_ref, b3_ref, w4_ref, b4_ref, o_ref,
                    *, add_output_nonlinearity):
    tb, n, din = x_ref.shape
    denc = w2_ref.shape[1]
    ddec = w4_ref.shape[1]
    mm_dtype = w1_ref.dtype  # bf16 (or f32 if bf16 matmul disabled)

    # Flatten (TB, N, Din) -> (TB*N, Din): one tall matmul instead of TB tiny ones.
    x = x_ref[...].reshape(tb * n, din).astype(mm_dtype)

    # ---- enc: Linear(Din, H) -> ReLU -> Linear(H, Denc) ----
    h = jnp.dot(x, w1_ref[...], preferred_element_type=jnp.float32) + b1_ref[...]
    h = jnp.maximum(h, 0.0)
    x_enc = jnp.dot(h.astype(mm_dtype), w2_ref[...],
                    preferred_element_type=jnp.float32) + b2_ref[...]
    x_enc = x_enc.reshape(tb, n, denc)            # (TB, N, Denc) f32

    # ---- mean over the set axis (pre-ReLU, matching the reference module) ----
    pooled = jnp.mean(x_enc, axis=1)              # (TB, Denc) f32

    # ---- dec: Linear(Denc, H) -> ReLU -> Linear(H, Ddec) ----
    h2 = jnp.dot(pooled.astype(mm_dtype), w3_ref[...],
                 preferred_element_type=jnp.float32) + b3_ref[...]
    h2 = jnp.maximum(h2, 0.0)
    x_dec = jnp.dot(h2.astype(mm_dtype), w4_ref[...],
                    preferred_element_type=jnp.float32) + b4_ref[...]   # (TB, Ddec)

    if add_output_nonlinearity:
        x_enc = jnp.maximum(x_enc, 0.0)
        x_dec = jnp.maximum(x_dec, 0.0)           # ReLU before broadcast (cheaper)

    # Direct lane-slice stores: no concatenate, no broadcast temp in HBM.
    o_ref[:, :, 0:denc] = x_enc.astype(o_ref.dtype)
    o_ref[:, :, denc:denc + ddec] = jnp.broadcast_to(
        x_dec[:, None, :], (tb, n, ddec)).astype(o_ref.dtype)


def _choose_block_batch(B, N, Din, Dout, H, Denc, *, target_rows=512,
                        vmem_budget_bytes=12 << 20):
    """How many batch elements each grid step processes."""
    # Aim for >= target_rows MXU rows (TB * N) per step.
    tb = max(1, min(B, max(1, target_rows // max(N, 1))))
    # Conservative VMEM budget (fits the default scoped limit on all chips):
    # double-buffered input/output blocks + the main f32 intermediates.
    io_bytes = 2 * N * (Din + Dout) * 4
    act_bytes = N * (H + Denc) * 4
    per_batch = io_bytes + act_bytes
    tb = max(1, min(tb, vmem_budget_bytes // max(per_batch, 1)))
    # No partial batch blocks -> per-set mean is exact and index math is trivial.
    while B % tb != 0:
        tb -= 1
    return tb


def deepset_encoder_block(x, params, *, add_output_nonlinearity=True,
                          use_bf16_matmul=True):
    """x: (B, N, dim_input) float32. params: transposed Linear weights/biases."""
    w1, b1, w2, b2, w3, b3, w4, b4 = params
    B, N, Din = x.shape
    H = w1.shape[1]
    Denc = w2.shape[1]
    Ddec = w4.shape[1]
    Dout = Denc + Ddec

    mm_dtype = jnp.bfloat16 if use_bf16_matmul else x.dtype
    w1, w2, w3, w4 = (w.astype(mm_dtype) for w in (w1, w2, w3, w4))
    b1, b2, b3, b4 = (b.astype(jnp.float32) for b in (b1, b2, b3, b4))

    TB = _choose_block_batch(B, N, Din, Dout, H, Denc)
    grid = (B // TB,)

    def const_spec(shape):
        nd = len(shape)
        return pl.BlockSpec(shape, lambda b, _nd=nd: (0,) * _nd)

    kernel = functools.partial(
        _deepset_kernel, add_output_nonlinearity=add_output_nonlinearity)

    return pl.pallas_call(
        kernel,
        out_shape=jax.ShapeDtypeStruct((B, N, Dout), x.dtype),
        grid_spec=pltpu.PrefetchScalarGridSpec(
            num_scalar_prefetch=0,
            grid=grid,
            in_specs=[
                pl.BlockSpec((TB, N, Din), lambda b: (b, 0, 0)),   # X chunk
                const_spec((Din, H)),    # enc W1^T (bf16)
                const_spec((1, H)),      # enc b1   (f32)
                const_spec((H, Denc)),   # enc W2^T
                const_spec((1, Denc)),   # enc b2
                const_spec((Denc, H)),   # dec W1^T
                const_spec((1, H)),      # dec b1
                const_spec((H, Ddec)),   # dec W2^T
                const_spec((1, Ddec)),   # dec b2
            ],
            out_specs=pl.BlockSpec((TB, N, Dout), lambda b: (b, 0, 0)),
        ),
        compiler_params=pltpu.CompilerParams(
            dimension_semantics=("parallel",)),
    )(x, w1, b1, w2, b2, w3, b3, w4, b4)


def init_params(key, dim_input, dim_output, dim_dec_output, dim_hidden):
    """Deterministic synthetic parameters, PyTorch-Linear-style uniform init,
    stored transposed (in, out). Biases kept 2D (1, out) for TPU layout."""
    dim_enc_output = dim_output - dim_dec_output

    def linear(k, fan_in, fan_out):
        k1, k2 = jax.random.split(k)
        bound = 1.0 / jnp.sqrt(fan_in)
        w = jax.random.uniform(k1, (fan_in, fan_out), jnp.float32, -bound, bound)
        b = jax.random.uniform(k2, (1, fan_out), jnp.float32, -bound, bound)
        return w, b

    k1, k2, k3, k4 = jax.random.split(key, 4)
    w1, b1 = linear(k1, dim_input, dim_hidden)
    w2, b2 = linear(k2, dim_hidden, dim_enc_output)
    w3, b3 = linear(k3, dim_enc_output, dim_hidden)
    w4, b4 = linear(k4, dim_hidden, dim_dec_output)
    return (w1, b1, w2, b2, w3, b3, w4, b4)


def reference_forward(x, params, *, add_output_nonlinearity=True):
    """Pure-JAX f32 reference matching the PyTorch module semantics."""
    w1, b1, w2, b2, w3, b3, w4, b4 = params
    h = jnp.maximum(x @ w1 + b1[0], 0.0)
    x_enc = h @ w2 + b2[0]                              # (B, N, Denc)
    pooled = x_enc.mean(axis=-2)                        # (B, Denc)
    h2 = jnp.maximum(pooled @ w3 + b3[0], 0.0)
    x_dec = h2 @ w4 + b4[0]                             # (B, Ddec)
    x_dec = jnp.broadcast_to(x_dec[:, None, :],
                             (x.shape[0], x.shape[1], x_dec.shape[-1]))
    out = jnp.concatenate([x_enc, x_dec], axis=2)
    if add_output_nonlinearity:
        out = jnp.maximum(out, 0.0)
    return out


if __name__ == "__main__":
    # Small shapes consistent with the module's forward:
    # X: (batch=2, num_inputs=8, dim_input=32)
    B, N = 2, 8
    dim_input = 32
    dim_hidden = 64
    dim_output = 48
    dim_dec_output = 16

    key = jax.random.PRNGKey(0)
    kx, kp = jax.random.split(key)
    x = jax.random.normal(kx, (B, N, dim_input), dtype=jnp.float32)
    params = init_params(kp, dim_input, dim_output, dim_dec_output, dim_hidden)

    out = deepset_encoder_block(x, params, add_output_nonlinearity=True)
    out = jax.block_until_ready(out)

    ref = reference_forward(x, params, add_output_nonlinearity=True)
    assert out.shape == (B, N, dim_output), out.shape
    # bf16 matmul inputs with f32 accumulation -> compare against the f32
    # reference with a bf16-appropriate tolerance.
    max_err = float(jnp.max(jnp.abs(out - ref)))
    assert jnp.allclose(out, ref, atol=5e-2, rtol=5e-2), \
        f"mismatch vs reference, max abs err={max_err}"

    print("KERNEL_OK")
</pallas_src>

<mosaic_0001>
module attributes {stable_mosaic.version = 11 : i64} {
  func.func @_deepset_kernel(%arg0: i32, %arg1: memref<2x8x32xf32, #tpu.memory_space<vmem>>, %arg2: memref<32x64xbf16, #tpu.memory_space<vmem>>, %arg3: memref<1x64xf32, #tpu.memory_space<vmem>>, %arg4: memref<64x32xbf16, #tpu.memory_space<vmem>>, %arg5: memref<1x32xf32, #tpu.memory_space<vmem>>, %arg6: memref<32x64xbf16, #tpu.memory_space<vmem>>, %arg7: memref<1x64xf32, #tpu.memory_space<vmem>>, %arg8: memref<64x16xbf16, #tpu.memory_space<vmem>>, %arg9: memref<1x16xf32, #tpu.memory_space<vmem>>, %arg10: memref<2x8x48xf32, #tpu.memory_space<vmem>>) attributes {dimension_semantics = [#tpu.dimension_semantics<parallel>], iteration_bounds = array<i64: 1>, scalar_prefetch = 0 : i64, scratch_operands = 0 : i64, tpu.core_type = #tpu.core_type<tc>, window_params = [{transform_indices = @transform_0, window_bounds = array<i64: 2, 8, 32>}, {pipeline_mode = #tpu.pipeline_mode<synchronous>, transform_indices = @transform_1, window_bounds = array<i64: 32, 64>}, {pipeline_mode = #tpu.pipeline_mode<synchronous>, transform_indices = @transform_2, window_bounds = array<i64: 1, 64>}, {pipeline_mode = #tpu.pipeline_mode<synchronous>, transform_indices = @transform_3, window_bounds = array<i64: 64, 32>}, {pipeline_mode = #tpu.pipeline_mode<synchronous>, transform_indices = @transform_4, window_bounds = array<i64: 1, 32>}, {pipeline_mode = #tpu.pipeline_mode<synchronous>, transform_indices = @transform_5, window_bounds = array<i64: 32, 64>}, {pipeline_mode = #tpu.pipeline_mode<synchronous>, transform_indices = @transform_6, window_bounds = array<i64: 1, 64>}, {pipeline_mode = #tpu.pipeline_mode<synchronous>, transform_indices = @transform_7, window_bounds = array<i64: 64, 16>}, {pipeline_mode = #tpu.pipeline_mode<synchronous>, transform_indices = @transform_8, window_bounds = array<i64: 1, 16>}, {transform_indices = @transform_9, window_bounds = array<i64: 2, 8, 48>}]} {
    %c0 = arith.constant 0 : index
    %c0_0 = arith.constant 0 : index
    %c0_1 = arith.constant 0 : index
    %0 = vector.load %arg1[%c0, %c0_0, %c0_1] : memref<2x8x32xf32, #tpu.memory_space<vmem>>, vector<2x8x32xf32>
    %1 = vector.shape_cast %0 : vector<2x8x32xf32> to vector<16x32xf32>
    %2 = arith.truncf %1 : vector<16x32xf32> to vector<16x32xbf16>
    %c0_2 = arith.constant 0 : index
    %c0_3 = arith.constant 0 : index
    %3 = vector.load %arg2[%c0_2, %c0_3] : memref<32x64xbf16, #tpu.memory_space<vmem>>, vector<32x64xbf16>
    %cst = arith.constant dense<0.000000e+00> : vector<16x64xf32>
    %4 = tpu.matmul %2, %3, %cst {dimension_numbers = #tpu.dot_dimension_numbers<[1], [0], [0], [1], [0, 0, 1, 1], [], []>} : vector<16x32xbf16>, vector<32x64xbf16>, vector<16x64xf32> -> vector<16x64xf32>
    %c0_4 = arith.constant 0 : index
    %c0_5 = arith.constant 0 : index
    %5 = vector.load %arg3[%c0_4, %c0_5] : memref<1x64xf32, #tpu.memory_space<vmem>>, vector<1x64xf32>
    %6 = vector.broadcast %5 : vector<1x64xf32> to vector<16x64xf32>
    %7 = arith.addf %4, %6 : vector<16x64xf32>
    %cst_6 = arith.constant 0.000000e+00 : f32
    %8 = vector.broadcast %cst_6 : f32 to vector<16x64xf32>
    %9 = arith.maximumf %7, %8 : vector<16x64xf32>
    %10 = arith.truncf %9 : vector<16x64xf32> to vector<16x64xbf16>
    %c0_7 = arith.constant 0 : index
    %c0_8 = arith.constant 0 : index
    %11 = vector.load %arg4[%c0_7, %c0_8] : memref<64x32xbf16, #tpu.memory_space<vmem>>, vector<64x32xbf16>
    %cst_9 = arith.constant dense<0.000000e+00> : vector<16x32xf32>
    %12 = tpu.matmul %10, %11, %cst_9 {dimension_numbers = #tpu.dot_dimension_numbers<[1], [0], [0], [1], [0, 0, 1, 1], [], []>} : vector<16x64xbf16>, vector<64x32xbf16>, vector<16x32xf32> -> vector<16x32xf32>
    %c0_10 = arith.constant 0 : index
    %c0_11 = arith.constant 0 : index
    %13 = vector.load %arg5[%c0_10, %c0_11] : memref<1x32xf32, #tpu.memory_space<vmem>>, vector<1x32xf32>
    %14 = vector.broadcast %13 : vector<1x32xf32> to vector<16x32xf32>
    %15 = arith.addf %12, %14 : vector<16x32xf32>
    %16 = vector.shape_cast %15 : vector<16x32xf32> to vector<2x8x32xf32>
    %cst_12 = arith.constant dense<0.000000e+00> : vector<2x32xf32>
    %17 = vector.multi_reduction <add>, %16, %cst_12 [1] : vector<2x8x32xf32> to vector<2x32xf32>
    %cst_13 = arith.constant 8.000000e+00 : f32
    %18 = vector.broadcast %cst_13 : f32 to vector<2x32xf32>
    %19 = arith.divf %17, %18 : vector<2x32xf32>
    %20 = arith.truncf %19 : vector<2x32xf32> to vector<2x32xbf16>
    %c0_14 = arith.constant 0 : index
    %c0_15 = arith.constant 0 : index
    %21 = vector.load %arg6[%c0_14, %c0_15] : memref<32x64xbf16, #tpu.memory_space<vmem>>, vector<32x64xbf16>
    %cst_16 = arith.constant dense<0.000000e+00> : vector<2x64xf32>
    %22 = tpu.matmul %20, %21, %cst_16 {dimension_numbers = #tpu.dot_dimension_numbers<[1], [0], [0], [1], [0, 0, 1, 1], [], []>} : vector<2x32xbf16>, vector<32x64xbf16>, vector<2x64xf32> -> vector<2x64xf32>
    %c0_17 = arith.constant 0 : index
    %c0_18 = arith.constant 0 : index
    %23 = vector.load %arg7[%c0_17, %c0_18] : memref<1x64xf32, #tpu.memory_space<vmem>>, vector<1x64xf32>
    %24 = vector.broadcast %23 : vector<1x64xf32> to vector<2x64xf32>
    %25 = arith.addf %22, %24 : vector<2x64xf32>
    %cst_19 = arith.constant 0.000000e+00 : f32
    %26 = vector.broadcast %cst_19 : f32 to vector<2x64xf32>
    %27 = arith.maximumf %25, %26 : vector<2x64xf32>
    %28 = arith.truncf %27 : vector<2x64xf32> to vector<2x64xbf16>
    %c0_20 = arith.constant 0 : index
    %c0_21 = arith.constant 0 : index
    %29 = vector.load %arg8[%c0_20, %c0_21] : memref<64x16xbf16, #tpu.memory_space<vmem>>, vector<64x16xbf16>
    %cst_22 = arith.constant dense<0.000000e+00> : vector<2x16xf32>
    %30 = tpu.matmul %28, %29, %cst_22 {dimension_numbers = #tpu.dot_dimension_numbers<[1], [0], [0], [1], [0, 0, 1, 1], [], []>} : vector<2x64xbf16>, vector<64x16xbf16>, vector<2x16xf32> -> vector<2x16xf32>
    %c0_23 = arith.constant 0 : index
    %c0_24 = arith.constant 0 : index
    %31 = vector.load %arg9[%c0_23, %c0_24] : memref<1x16xf32, #tpu.memory_space<vmem>>, vector<1x16xf32>
    %32 = vector.broadcast %31 : vector<1x16xf32> to vector<2x16xf32>
    %33 = arith.addf %30, %32 : vector<2x16xf32>
    %cst_25 = arith.constant 0.000000e+00 : f32
    %34 = vector.broadcast %cst_25 : f32 to vector<2x8x32xf32>
    %35 = arith.maximumf %16, %34 : vector<2x8x32xf32>
    %cst_26 = arith.constant 0.000000e+00 : f32
    %36 = vector.broadcast %cst_26 : f32 to vector<2x16xf32>
    %37 = arith.maximumf %33, %36 : vector<2x16xf32>
    %c0_27 = arith.constant 0 : index
    %c0_28 = arith.constant 0 : index
    %c0_29 = arith.constant 0 : index
    %38 = vector.load %arg10[%c0_27, %c0_28, %c0_29] : memref<2x8x48xf32, #tpu.memory_space<vmem>>, vector<2x8x32xf32>
    tpu.vector_store %arg10[%c0_27, %c0_28, %c0_29], %35 {strides = array<i32>} : memref<2x8x48xf32, #tpu.memory_space<vmem>>, vector<2x8x32xf32>,
    %39 = vector.shape_cast %37 : vector<2x16xf32> to vector<2x1x16xf32>
    %40 = vector.shape_cast %39 : vector<2x1x16xf32> to vector<2x1x16xf32>
    %41 = vector.broadcast %40 : vector<2x1x16xf32> to vector<2x8x16xf32>
    %c0_30 = arith.constant 0 : index
    %c0_31 = arith.constant 0 : index
    %c32 = arith.constant 32 : index
    %42 = vector.load %arg10[%c0_30, %c0_31, %c32] : memref<2x8x48xf32, #tpu.memory_space<vmem>>, vector<2x8x16xf32>
    tpu.vector_store %arg10[%c0_30, %c0_31, %c32], %41 {strides = array<i32>} : memref<2x8x48xf32, #tpu.memory_space<vmem>>, vector<2x8x16xf32>,
    return
  }
  func.func @transform_0(%arg0: i32) -> (i32, i32, i32) {
    %c0_i32 = arith.constant 0 : i32
    %c0_i32_0 = arith.constant 0 : i32
    %c0_i32_1 = arith.constant 0 : i32
    return %arg0, %c0_i32, %c0_i32_0 : i32, i32, i32
  }
  func.func @transform_1(%arg0: i32) -> (i32, i32) {
    %c0_i32 = arith.constant 0 : i32
    %c0_i32_0 = arith.constant 0 : i32
    %c0_i32_1 = arith.constant 0 : i32
    return %c0_i32, %c0_i32_0 : i32, i32
  }
  func.func @transform_2(%arg0: i32) -> (i32, i32) {
    %c0_i32 = arith.constant 0 : i32
    %c0_i32_0 = arith.constant 0 : i32
    %c0_i32_1 = arith.constant 0 : i32
    return %c0_i32, %c0_i32_0 : i32, i32
  }
  func.func @transform_3(%arg0: i32) -> (i32, i32) {
    %c0_i32 = arith.constant 0 : i32
    %c0_i32_0 = arith.constant 0 : i32
    %c0_i32_1 = arith.constant 0 : i32
    return %c0_i32, %c0_i32_0 : i32, i32
  }
  func.func @transform_4(%arg0: i32) -> (i32, i32) {
    %c0_i32 = arith.constant 0 : i32
    %c0_i32_0 = arith.constant 0 : i32
    %c0_i32_1 = arith.constant 0 : i32
    return %c0_i32, %c0_i32_0 : i32, i32
  }
  func.func @transform_5(%arg0: i32) -> (i32, i32) {
    %c0_i32 = arith.constant 0 : i32
    %c0_i32_0 = arith.constant 0 : i32
    %c0_i32_1 = arith.constant 0 : i32
    return %c0_i32, %c0_i32_0 : i32, i32
  }
  func.func @transform_6(%arg0: i32) -> (i32, i32) {
    %c0_i32 = arith.constant 0 : i32
    %c0_i32_0 = arith.constant 0 : i32
    %c0_i32_1 = arith.constant 0 : i32
    return %c0_i32, %c0_i32_0 : i32, i32
  }
  func.func @transform_7(%arg0: i32) -> (i32, i32) {
    %c0_i32 = arith.constant 0 : i32
    %c0_i32_0 = arith.constant 0 : i32
    %c0_i32_1 = arith.constant 0 : i32
    return %c0_i32, %c0_i32_0 : i32, i32
  }
  func.func @transform_8(%arg0: i32) -> (i32, i32) {
    %c0_i32 = arith.constant 0 : i32
    %c0_i32_0 = arith.constant 0 : i32
    %c0_i32_1 = arith.constant 0 : i32
    return %c0_i32, %c0_i32_0 : i32, i32
  }
  func.func @transform_9(%arg0: i32) -> (i32, i32, i32) {
    %c0_i32 = arith.constant 0 : i32
    %c0_i32_0 = arith.constant 0 : i32
    %c0_i32_1 = arith.constant 0 : i32
    return %arg0, %c0_i32, %c0_i32_0 : i32, i32, i32
  }
}

</mosaic_0001>

<llo_original>
// kernel: tpu_custom_call.1
$region0: #{tpu_custom_call.1}
  #allocation0 [shape = 'u32[]', space=smem, size = 0x4, offset = 0x4, fixed_abs, tag = 'smem constant byte address 0x4 - core index']
  #allocation1 [shape = 'u32[72,128]{1,0:T(1,128)}', space=vmem, size = 0x9000, scoped, tag = 'internal scratch']
  %s0 = inlined_call_operand.vmem [shape: f32[2,8,32], index: 0, kind: input, shape index: {}]
  %s1 = inlined_call_operand.vmem [shape: bf16[32,64], index: 1, kind: input, shape index: {}]
  %s2 = inlined_call_operand.vmem [shape: f32[1,64], index: 2, kind: input, shape index: {}]
  %s3 = inlined_call_operand.vmem [shape: bf16[64,32], index: 3, kind: input, shape index: {}]
  %s4 = inlined_call_operand.vmem [shape: f32[1,32], index: 4, kind: input, shape index: {}]
  %s5 = inlined_call_operand.vmem [shape: bf16[32,64], index: 5, kind: input, shape index: {}]
  %s6 = inlined_call_operand.vmem [shape: f32[1,64], index: 6, kind: input, shape index: {}]
  %s7 = inlined_call_operand.vmem [shape: bf16[64,16], index: 7, kind: input, shape index: {}]
  %s8 = inlined_call_operand.vmem [shape: f32[1,16], index: 8, kind: input, shape index: {}]
  %s9 = inlined_call_operand.hbm [shape: f32[2,8,48], index: 9, kind: output, shape index: {}]
  %s10 = sld [smem:[#allocation0]]
  $region46: #{tpu_custom_call.1} parent=0
    _
  %s12 = ssub.s32 1, %s10
  %s13 = scalar_select 0, %s12, %s10
  $region1: #{tpu_custom_call.1} parent=0
    #allocation2 [shape = 'u8[8192]{0}', space=vmem, size = 0x2000, scoped, tag = 'output window, operand 0, single buffered']
    #allocation3 [shape = 's32[1]{0}', space=sflag, size = 0x4, scoped, tag = 'scoped memory for tpu_custom_call.1']
    %14 = vsyncpa [#allocation3], 0
    // Predicated region
    $region2: #{tpu_custom_call.1} parent=1 // pred_check
      _
    $region3: #{tpu_custom_call.1} parent=1 // pred_check_branch
      %16 = sbr.rel (0) target = $region5
    $region4: #{tpu_custom_call.1} parent=1 // pred_region
      _
    $region5: #{tpu_custom_call.1} parent=1 // pred_fallthru
      _
    // Predicated region
    $region6: #{tpu_custom_call.1} parent=1 // pred_check
      _
    $region7: #{tpu_custom_call.1} parent=1 // pred_check_branch
      %18 = sbr.rel (0) target = $region9
    $region8: #{tpu_custom_call.1} parent=1 // pred_region
      _
    $region9: #{tpu_custom_call.1} parent=1 // pred_fallthru
      _
    // Predicated region
    $region10: #{tpu_custom_call.1} parent=1 // pred_check
      _
    $region11: #{tpu_custom_call.1} parent=1 // pred_check_branch
      %20 = sbr.rel (0) target = $region13
    $region12: #{tpu_custom_call.1} parent=1 // pred_region
      _
    $region13: #{tpu_custom_call.1} parent=1 // pred_fallthru
      _
    // Predicated region
    $region14: #{tpu_custom_call.1} parent=1 // pred_check
      _
    $region15: #{tpu_custom_call.1} parent=1 // pred_check_branch
      %22 = sbr.rel (0) target = $region17
    $region16: #{tpu_custom_call.1} parent=1 // pred_region
      _
    $region17: #{tpu_custom_call.1} parent=1 // pred_fallthru
      _
    // Predicated region
    $region18: #{tpu_custom_call.1} parent=1 // pred_check
      _
    $region19: #{tpu_custom_call.1} parent=1 // pred_check_branch
      %24 = sbr.rel (0) target = $region21
    $region20: #{tpu_custom_call.1} parent=1 // pred_region
      _
    $region21: #{tpu_custom_call.1} parent=1 // pred_fallthru
      _
    // Predicated region
    $region22: #{tpu_custom_call.1} parent=1 // pred_check
      _
    $region23: #{tpu_custom_call.1} parent=1 // pred_check_branch
      %26 = sbr.rel (0) target = $region25
    $region24: #{tpu_custom_call.1} parent=1 // pred_region
      _
    $region25: #{tpu_custom_call.1} parent=1 // pred_fallthru
      _
    // Predicated region
    $region26: #{tpu_custom_call.1} parent=1 // pred_check
      _
    $region27: #{tpu_custom_call.1} parent=1 // pred_check_branch
      %28 = sbr.rel (0) target = $region29
    $region28: #{tpu_custom_call.1} parent=1 // pred_region
      _
    $region29: #{tpu_custom_call.1} parent=1 // pred_fallthru
      _
    // Predicated region
    $region30: #{tpu_custom_call.1} parent=1 // pred_check
      _
    $region31: #{tpu_custom_call.1} parent=1 // pred_check_branch
      %30 = sbr.rel (0) target = $region33
    $region32: #{tpu_custom_call.1} parent=1 // pred_region
      _
    $region33: #{tpu_custom_call.1} parent=1 // pred_fallthru
      _
    // Predicated region
    $region34: #{tpu_custom_call.1} parent=1 // pred_check
      _
    $region35: #{tpu_custom_call.1} parent=1 // pred_check_branch
      %32 = sbr.rel (0) target = $region37
    $region36: #{tpu_custom_call.1} parent=1 // pred_region
      _
    $region37: #{tpu_custom_call.1} parent=1 // pred_fallthru
      _
    %v34 = vld [vmem:[%s0] sm:$0xff]
    %v35 = vld [vmem:[%s0 + $0x8] sm:$0xff]
    %v36 = vpack.c.bf16 %v35, %v34
    %v37 = vld [vmem:[%s1] sm:$0xf]
    %v38 = vld [vmem:[%s1 + $0x4] sm:$0xf]
    %v39 = vld [vmem:[%s1 + $0x8] sm:$0xf]
    %v40 = vld [vmem:[%s1 + $0xc] sm:$0xf]
    %v41 = vld [vmem:[%s2] sm:$0x1]
    %v43 = vperm.slane %v41, 0
    %v49 = vunpack.c.l.b16 %v37
    %v50 = vunpack.c.l.b16 %v38
    %v51 = vunpack.c.l.b16 %v39
    %v52 = vunpack.c.l.b16 %v40
    %v53 = vpack.c.b16 %v50, %v49
    %v54 = vpack.c.b16 %v52, %v51
    %vm57 = vcmask 261120
    %v59 = vsel %vm57, %v36, 0
    %61 = vmatpush.bf16.msra.mxu0 0
    %62 = vmatpush.bf16.msra.mxu0 0
    %63 = vmatpush.bf16.msra.mxu0 0
    %64 = vmatpush.bf16.msra.mxu0 0
    %65 = vmatpush.bf16.msra.mxu0 0
    %66 = vmatpush.bf16.msra.mxu0 0
    %67 = vmatpush.bf16.msra.mxu0 %v54
    %68 = vmatpush.bf16.msra.mxu0 %v53
    %69 = vmatmul.bf16.gmra.mxu0 %v59
    %v70 = vpop.f32.mrf.mxu0
    %v71 = vadd.f32 %v43, %v70
    %v72 = vpop.f32.mrf.mxu0
    %v73 = vadd.f32 %v43, %v72
    %74 = vdwg.mxu0
    %v75 = vmax.f32 %v71, 0.0
    %v76 = vmax.f32 %v73, 0.0
    %v77 = vpack.c.bf16 %v76, %v75
    %v78 = vld [vmem:[%s3] sm:$0xf]
    %v79 = vld [vmem:[%s3 + $0x4] sm:$0xf]
    %v80 = vld [vmem:[%s3 + $0x8] sm:$0xf]
    %v81 = vld [vmem:[%s3 + $0xc] sm:$0xf]
    %v82 = vld [vmem:[%s3 + $0x10] sm:$0xf]
    %v83 = vld [vmem:[%s3 + $0x14] sm:$0xf]
    %v84 = vld [vmem:[%s3 + $0x18] sm:$0xf]
    %v85 = vld [vmem:[%s3 + $0x1c] sm:$0xf]
    %v86 = vld [vmem:[%s4] sm:$0x1]
    %v88 = vperm.slane %v86, 0
    %v98 = vunpack.c.l.b16 %v78
    %v99 = vunpack.c.l.b16 %v79
    %v100 = vunpack.c.l.b16 %v80
    %v101 = vunpack.c.l.b16 %v81
    %v102 = vunpack.c.l.b16 %v82
    %v103 = vunpack.c.l.b16 %v83
    %v104 = vunpack.c.l.b16 %v84
    %v105 = vunpack.c.l.b16 %v85
    %v106 = vpack.c.b16 %v99, %v98
    %v107 = vpack.c.b16 %v101, %v100
    %v108 = vpack.c.b16 %v103, %v102
    %v109 = vpack.c.b16 %v105, %v104
    %vm114 = vcmask 523264
    %v116 = vsel %vm114, %v77, 0
    %118 = vmatpush.bf16.msra.mxu0 0
    %119 = vmatpush.bf16.msra.mxu0 0
    %120 = vmatpush.bf16.msra.mxu0 0
    %121 = vmatpush.bf16.msra.mxu0 0
    %122 = vmatpush.bf16.msra.mxu0 %v109
    %123 = vmatpush.bf16.msra.mxu0 %v108
    %124 = vmatpush.bf16.msra.mxu0 %v107
    %125 = vmatpush.bf16.msra.mxu0 %v106
    %126 = vmatmul.bf16.gmra.mxu0 %v116
    %v127 = vpop.f32.mrf.mxu0
    %v128 = vadd.f32 %v88, %v127
    %v129 = vpop.f32.mrf.mxu0
    %v130 = vadd.f32 %v88, %v129
    %131 = vdwg.mxu0
    %v132 = vsel %vm57, %v128, 0.0
    %v133 = vrot.slane %v132, 4
    %v134 = vadd.f32 %v132, %v133
    %v135 = vrot.slane %v134, 2
    %v136 = vadd.f32 %v134, %v135
    %v137 = vrot.slane %v136, 1
    %v138 = vadd.f32 %v136, %v137
    %v139 = vsel %vm57, %v130, 0.0
    %v140 = vrot.slane %v139, 4
    %v141 = vadd.f32 %v139, %v140
    %v142 = vrot.slane %v141, 2
    %v143 = vadd.f32 %v141, %v142
    %v144 = vrot.slane %v143, 1
    %v145 = vadd.f32 %v143, %v144
    %v146 = vrcp.pop 8.0
    %v147 = vmul.f32 8.0, %v146
    %v148 = vsub.f32 1.0, %v147
    %v149 = vmul.f32 %v146, %v148
    %v150 = vadd.f32 %v146, %v149
    %vm151 = vweird.f32 %v146
    %v152 = vsel %vm151, %v146, %v150
    %v153 = vmul.f32 %v138, %v152
    %v154 = vmul.f32 %v145, %v152
    %v155 = vpack.c.bf16 %v153, %v153
    %v156 = vpack.c.bf16 %v154, %v154
    %v157 = vld [vmem:[%s5] sm:$0xf]
    %v158 = vld [vmem:[%s5 + $0x4] sm:$0xf]
    %v159 = vld [vmem:[%s5 + $0x8] sm:$0xf]
    %v160 = vld [vmem:[%s5 + $0xc] sm:$0xf]
    %v161 = vld [vmem:[%s6] sm:$0x1]
    %v163 = vperm.slane %v161, 0
    %v167 = vunpack.c.l.b16 %v155
    %v168 = vunpack.c.l.b16 %v156
    %vm169 = vcmask 1041409
    %v170 = vsel %vm169, %v168, %v167
    %v171 = vpack.c.b16 %v170, %v170
    %v176 = vunpack.c.l.b16 %v157
    %v177 = vunpack.c.l.b16 %v158
    %v178 = vunpack.c.l.b16 %v159
    %v179 = vunpack.c.l.b16 %v160
    %v180 = vpack.c.b16 %v177, %v176
    %v181 = vpack.c.b16 %v179, %v178
    %v185 = vsel %vm57, %v171, 0
    %187 = vmatpush.bf16.msra.mxu0 0
    %188 = vmatpush.bf16.msra.mxu0 0
    %189 = vmatpush.bf16.msra.mxu0 0
    %190 = vmatpush.bf16.msra.mxu0 0
    %191 = vmatpush.bf16.msra.mxu0 0
    %192 = vmatpush.bf16.msra.mxu0 0
    %193 = vmatpush.bf16.msra.mxu0 %v181
    %194 = vmatpush.bf16.msra.mxu0 %v180
    %195 = vmatmul.bf16.gmra.mxu0 %v185
    %v196 = vpop.f32.mrf.mxu0
    %v197 = vadd.f32 %v163, %v196
    %v198 = vpop.f32.mrf.mxu0
    %199 = vdwg.mxu0
    %v200 = vmax.f32 %v197, 0.0
    %v201 = vpack.c.bf16 %v200, %v200
    %v202 = vld [vmem:[%s7] sm:$0xf]
    %v203 = vld [vmem:[%s7 + $0x4] sm:$0xf]
    %v204 = vld [vmem:[%s7 + $0x8] sm:$0xf]
    %v205 = vld [vmem:[%s7 + $0xc] sm:$0xf]
    %v206 = vld [vmem:[%s7 + $0x10] sm:$0xf]
    %v207 = vld [vmem:[%s7 + $0x14] sm:$0xf]
    %v208 = vld [vmem:[%s7 + $0x18] sm:$0xf]
    %v209 = vld [vmem:[%s7 + $0x1c] sm:$0xf]
    %v210 = vld [vmem:[%s8] sm:$0x1]
    %v212 = vperm.slane %v210, 0
    %v222 = vunpack.c.l.b16 %v202
    %v223 = vunpack.c.l.b16 %v203
    %v224 = vunpack.c.l.b16 %v204
    %v225 = vunpack.c.l.b16 %v205
    %v226 = vunpack.c.l.b16 %v206
    %v227 = vunpack.c.l.b16 %v207
    %v228 = vunpack.c.l.b16 %v208
    %v229 = vunpack.c.l.b16 %v209
    %v230 = vpack.c.b16 %v223, %v222
    %v231 = vpack.c.b16 %v225, %v224
    %v232 = vpack.c.b16 %v227, %v226
    %v233 = vpack.c.b16 %v229, %v228
    %v239 = vsel %vm114, %v201, 0
    %241 = vmatpush.bf16.msra.mxu0 0
    %242 = vmatpush.bf16.msra.mxu0 0
    %243 = vmatpush.bf16.msra.mxu0 0
    %244 = vmatpush.bf16.msra.mxu0 0
    %245 = vmatpush.bf16.msra.mxu0 %v233
    %246 = vmatpush.bf16.msra.mxu0 %v232
    %247 = vmatpush.bf16.msra.mxu0 %v231
    %248 = vmatpush.bf16.msra.mxu0 %v230
    %249 = vmatmul.bf16.gmra.mxu0 %v239
    %v250 = vpop.f32.mrf.mxu0
    %v251 = vadd.f32 %v212, %v250
    %v252 = vpop.f32.mrf.mxu0
    %253 = vdwg.mxu0
    %v254 = vmax.f32 %v128, 0.0
    %v255 = vmax.f32 %v130, 0.0
    %v256 = vmax.f32 %v251, 0.0
    %257 = vst.msk [vmem:[#allocation2] sm:$0xff] %vm57, %v254
    %258 = vst.msk [vmem:[#allocation2 + $0x8] sm:$0xff] %vm57, %v255
    %v260 = vrot.slane %v256, 1
    %v261 = vperm.slane %v256, 0
    %v262 = vperm.slane %v260, 0
    %263 = vrot.lane.b32.xlu0 %v261, 32
    %v264 = vpop.permute.xlu0 %263
    %265 = vrot.lane.b32.xlu0 %v262, 32
    %v266 = vpop.permute.xlu0 %265
    %vm269 = vcmask 392448
    %270 = vst.msk [vmem:[#allocation2] sm:$0xff] %vm269, %v264
    %271 = vst.msk [vmem:[#allocation2 + $0x8] sm:$0xff] %vm269, %v266
    // Predicated region
    $region38: #{tpu_custom_call.1} parent=1 // pred_check
      _
    $region39: #{tpu_custom_call.1} parent=1 // pred_check_branch
      %273 = sbr.rel (0) target = $region41
    $region40: #{tpu_custom_call.1} parent=1 // pred_region
      %275 = vsyncadd [#allocation3], 0
      %s276 = sshll.u32 [#allocation2], 4
      %s277 = int_to_ptr.vmem [resolvable:$true] %s276
      %s278 = sshll.u32 %s9, 4
      %s279 = int_to_ptr.hbm [resolvable:$true] %s278
      %284 = dma.vmem_to_hbm [thread:$0]  %s277, 256, %s279, [#allocation3], 128, 128, 8
    $region41: #{tpu_custom_call.1} parent=1 // pred_fallthru
      _
    // Predicated region
    $region42: #{tpu_custom_call.1} parent=1 // pred_check
      _
    $region43: #{tpu_custom_call.1} parent=1 // pred_check_branch
      %286 = sbr.rel (0) target = $region45
    $region44: #{tpu_custom_call.1} parent=1 // pred_region
      %288 = dma.done [#allocation3], 256
    $region45: #{tpu_custom_call.1} parent=1 // pred_fallthru
      _
    %289 = vsyncpa [#allocation3], 1

</llo_original>
